<compile_context>
chip_gen: v7x
topology: tpu7x:2x2x1
jax: 0.10.0
libtpu: 0.0.40
codegen_flags: <defaults>
</compile_context>

<pallas_src>
import jax
import jax.numpy as jnp
from jax.experimental import pallas as pl
from jax.experimental.pallas import tpu as pltpu


def _round_up(x, m):
    return (x + m - 1) // m * m


def _cdiv(a, b):
    return (a + b - 1) // b


def _vmem_capacity_bytes():
    try:
        info = pltpu.get_tpu_info()
        cap = getattr(info, "vmem_capacity_bytes", None)
        if cap:
            return int(cap)
    except Exception:
        pass
    return 64 * 1024 * 1024  # conservative fallback (v7x per-TC VMEM)


def weighted_loss(y_true, y_pred, weights, tau_seq, eps=1e-3,
                  vmem_budget_bytes=None):
    """Pallas implementation of WeightedLoss.forward.

    y_true:  [B, D]      (any float dtype)
    y_pred:  [B, NT, D]  (NT = len(tau_seq))
    weights: [B, D]
    returns: scalar f32
    """
    B, D = y_true.shape
    Bp, n_tau, Dp = y_pred.shape
    assert Bp == B and Dp == D and n_tau == len(tau_seq)
    eps = float(eps)
    ntd = n_tau * D

    # Free (contiguous) collapse of the tau axis into lanes.
    y_pred2d = y_pred.reshape(B, ntd)

    # Per-lane quantile row: [tau0]*D ++ [tau1]*D ++ ...  (tiny constant input)
    tau_row = jnp.repeat(jnp.asarray([float(t) for t in tau_seq], jnp.float32),
                         D).reshape(1, ntd)

    # --- VMEM budget & B (sublane) tile size, from padded layout dims -------
    vmem_cap = _vmem_capacity_bytes()
    if vmem_budget_bytes is None:
        vmem_budget_bytes = vmem_cap // 2

    d_pad = _round_up(D, 128)
    ntd_pad = _round_up(ntd, 128)
    per_row_bytes = 2 * (y_true.dtype.itemsize * d_pad        # double-buffered
                         + weights.dtype.itemsize * d_pad
                         + y_pred.dtype.itemsize * ntd_pad)

    tb = (vmem_budget_bytes // per_row_bytes) // 8 * 8
    tb = min(tb, 2048)                          # amortizes ~0.35us/grid step
    tb = min(tb, _round_up(_cdiv(B, 2), 8))     # >=2 tiles -> both v7x TCs busy
    tb = min(tb, _round_up(B, 8))               # never exceed the batch
    tb = max(tb, 8)
    num_b_tiles = _cdiv(B, tb)

    # vmem_limit derived from the actual footprint (+ headroom), capped at
    # 3/4 of physical capacity so it is safe on v7x's 64 MiB VMEM.
    footprint = tb * per_row_bytes + 2 * (8 * 128 * 4) + (1 * ntd_pad * 4)
    vmem_limit = int(footprint * 1.25) + (4 << 20)
    vmem_limit = max(vmem_limit, 16 << 20)
    vmem_limit = min(vmem_limit, (vmem_cap * 3) // 4)

    needs_mask = (B % tb) != 0

    def kernel(yt_ref, yp_ref, w_ref, tau_ref, out_ref):
        # Cast after the DMA (inputs stay in native dtype in HBM/VMEM).
        yt = yt_ref[...].astype(jnp.float32)     # (tb, D)
        w = w_ref[...].astype(jnp.float32)       # (tb, D)
        yp = yp_ref[...].astype(jnp.float32)     # (tb, NT*D)
        tau = tau_ref[...]                       # (1,  NT*D) f32

        # One lane-dense elementwise pass over all taus at once.
        yt_t = jnp.tile(yt, (1, n_tau))          # (tb, NT*D)
        w_t = jnp.tile(w, (1, n_tau))            # (tb, NT*D)

        err = yt_t - yp
        abs_err = jnp.abs(err)
        h = jnp.where(abs_err < eps,
                      err * err * (0.5 / eps),
                      abs_err - 0.5 * eps)
        e = w_t * h
        # max(tau*e, (tau-1)*e) == tau*e + max(-e, 0)
        val = tau * e + jnp.maximum(-e, 0.0)

        if needs_mask:
            # Mask tail rows of the (possibly out-of-bounds) last tile.
            row = (pl.program_id(0) * tb
                   + jax.lax.broadcasted_iota(jnp.int32, (tb, 1), 0))
            val = jnp.where(row < B, val, 0.0)

        # Raw partial sum per B tile, written as a lane-dense (8,128) block.
        out_ref[...] = jnp.broadcast_to(jnp.sum(val), (1, 8, 128))

    partials = pl.pallas_call(
        kernel,
        out_shape=jax.ShapeDtypeStruct((num_b_tiles, 8, 128), jnp.float32),
        grid_spec=pltpu.PrefetchScalarGridSpec(
            num_scalar_prefetch=0,
            grid=(num_b_tiles,),
            in_specs=[
                pl.BlockSpec((tb, D), lambda b: (b, 0)),      # y_true
                pl.BlockSpec((tb, ntd), lambda b: (b, 0)),    # y_pred [B,NT*D]
                pl.BlockSpec((tb, D), lambda b: (b, 0)),      # weights
                pl.BlockSpec((1, ntd), lambda b: (0, 0)),     # tau lane row
            ],
            out_specs=pl.BlockSpec((1, 8, 128), lambda b: (b, 0, 0)),
        ),
        compiler_params=pltpu.CompilerParams(
            dimension_semantics=("parallel",),   # shard B tiles on v7x's 2 TCs
            vmem_limit_bytes=vmem_limit,
        ),
    )(y_true, y_pred2d, weights, tau_row)

    # Single normalization: sum of raw partials / (NT * B * D)
    # == mean over B*D per tau, averaged over taus.
    return jnp.sum(partials[:, 0, 0]) / (n_tau * B * D)


def _reference(y_true, y_pred, weights, tau_seq, eps=1e-3):
    """Pure-JAX reference matching the PyTorch module semantics."""
    total = 0.0
    for i, tau in enumerate(tau_seq):
        err = y_true - y_pred[:, i]
        abs_e = jnp.abs(err)
        h = jnp.where(abs_e < eps, err ** 2 / (2.0 * eps), abs_e - 0.5 * eps)
        e = weights * h
        total = total + jnp.mean(jnp.maximum(tau * e, (tau - 1.0) * e))
    return total / len(tau_seq)


if __name__ == "__main__":
    key = jax.random.PRNGKey(0)
    k1, k2, k3 = jax.random.split(key, 3)

    # Small shapes consistent with the module's forward.
    B, D = 2, 16
    tau_seq = [0.25, 0.5, 0.75]

    y_true = jax.random.normal(k1, (B, D), jnp.float32)
    y_pred = jax.random.normal(k2, (B, len(tau_seq), D), jnp.float32)
    weights = jax.random.uniform(k3, (B, D), jnp.float32)

    out = weighted_loss(y_true, y_pred, weights, tau_seq)
    out = jax.block_until_ready(out)
    ref = _reference(y_true, y_pred, weights, tau_seq)
    assert jnp.allclose(out, ref, rtol=1e-5, atol=1e-6), (out, ref)

    # Second check: ragged B (not a tile multiple) with a tiny forced VMEM
    # budget to exercise the multi-tile + tail-row-masking path.
    B2 = 20
    k4, k5, k6 = jax.random.split(jax.random.PRNGKey(1), 3)
    y_true2 = jax.random.normal(k4, (B2, D), jnp.float32)
    y_pred2 = jax.random.normal(k5, (B2, len(tau_seq), D), jnp.float32)
    weights2 = jax.random.uniform(k6, (B2, D), jnp.float32)

    out2 = weighted_loss(y_true2, y_pred2, weights2, tau_seq,
                         vmem_budget_bytes=8 * 1024)
    out2 = jax.block_until_ready(out2)
    ref2 = _reference(y_true2, y_pred2, weights2, tau_seq)
    assert jnp.allclose(out2, ref2, rtol=1e-5, atol=1e-6), (out2, ref2)

    print("KERNEL_OK")
</pallas_src>

<mosaic_0001>
module attributes {stable_mosaic.version = 11 : i64} {
  func.func @kernel(%arg0: i32, %arg1: memref<8x16xf32, #tpu.memory_space<vmem>>, %arg2: memref<8x48xf32, #tpu.memory_space<vmem>>, %arg3: memref<8x16xf32, #tpu.memory_space<vmem>>, %arg4: memref<1x48xf32, #tpu.memory_space<vmem>>, %arg5: memref<1x8x128xf32, #tpu.memory_space<vmem>>) attributes {dimension_semantics = [#tpu.dimension_semantics<parallel>], iteration_bounds = array<i64: 1>, scalar_prefetch = 0 : i64, scratch_operands = 0 : i64, tpu.core_type = #tpu.core_type<tc>, window_params = [{transform_indices = @transform_0, window_bounds = array<i64: 8, 16>}, {transform_indices = @transform_1, window_bounds = array<i64: 8, 48>}, {transform_indices = @transform_2, window_bounds = array<i64: 8, 16>}, {pipeline_mode = #tpu.pipeline_mode<synchronous>, transform_indices = @transform_3, window_bounds = array<i64: 1, 48>}, {transform_indices = @transform_4, window_bounds = array<i64: 1, 8, 128>}]} {
    %c0 = arith.constant 0 : index
    %c0_0 = arith.constant 0 : index
    %0 = vector.load %arg1[%c0, %c0_0] : memref<8x16xf32, #tpu.memory_space<vmem>>, vector<8x16xf32>
    %c0_1 = arith.constant 0 : index
    %c0_2 = arith.constant 0 : index
    %1 = vector.load %arg3[%c0_1, %c0_2] : memref<8x16xf32, #tpu.memory_space<vmem>>, vector<8x16xf32>
    %c0_3 = arith.constant 0 : index
    %c0_4 = arith.constant 0 : index
    %2 = vector.load %arg2[%c0_3, %c0_4] : memref<8x48xf32, #tpu.memory_space<vmem>>, vector<8x48xf32>
    %c0_5 = arith.constant 0 : index
    %c0_6 = arith.constant 0 : index
    %3 = vector.load %arg4[%c0_5, %c0_6] : memref<1x48xf32, #tpu.memory_space<vmem>>, vector<1x48xf32>
    %4 = tpu.concatenate %0, %0, %0 in 1 : vector<8x16xf32>, vector<8x16xf32>, vector<8x16xf32> -> vector<8x48xf32>
    %5 = tpu.concatenate %1, %1, %1 in 1 : vector<8x16xf32>, vector<8x16xf32>, vector<8x16xf32> -> vector<8x48xf32>
    %6 = arith.subf %4, %2 : vector<8x48xf32>
    %7 = math.absf %6 : vector<8x48xf32>
    %cst = arith.constant 1.000000e-03 : f32
    %8 = vector.broadcast %cst : f32 to vector<8x48xf32>
    %9 = arith.cmpf olt, %7, %8 : vector<8x48xf32>
    %10 = arith.mulf %6, %6 : vector<8x48xf32>
    %cst_7 = arith.constant 5.000000e+02 : f32
    %11 = vector.broadcast %cst_7 : f32 to vector<8x48xf32>
    %12 = arith.mulf %10, %11 : vector<8x48xf32>
    %cst_8 = arith.constant 5.000000e-04 : f32
    %13 = vector.broadcast %cst_8 : f32 to vector<8x48xf32>
    %14 = arith.subf %7, %13 : vector<8x48xf32>
    %15 = arith.select %9, %12, %14 : vector<8x48xi1>, vector<8x48xf32>
    %16 = arith.mulf %5, %15 : vector<8x48xf32>
    %17 = vector.broadcast %3 : vector<1x48xf32> to vector<8x48xf32>
    %18 = arith.mulf %17, %16 : vector<8x48xf32>
    %cst_9 = arith.constant 0.000000e+00 : f32
    %19 = vector.broadcast %cst_9 : f32 to vector<8x48xf32>
    %20 = arith.subf %19, %16 : vector<8x48xf32>
    %cst_10 = arith.constant 0.000000e+00 : f32
    %21 = vector.broadcast %cst_10 : f32 to vector<8x48xf32>
    %22 = arith.maximumf %20, %21 : vector<8x48xf32>
    %23 = arith.addf %18, %22 : vector<8x48xf32>
    %c8_i32 = arith.constant 8 : i32
    %24 = arith.muli %arg0, %c8_i32 : i32
    %25 = tpu.iota {dimensions = array<i32: 0>} : vector<8x1xi32>
    %26 = vector.broadcast %24 : i32 to vector<8x1xi32>
    %27 = arith.addi %26, %25 : vector<8x1xi32>
    %c2_i32 = arith.constant 2 : i32
    %28 = vector.broadcast %c2_i32 : i32 to vector<8x1xi32>
    %29 = arith.cmpi slt, %27, %28 : vector<8x1xi32>
    %cst_11 = arith.constant 0.000000e+00 : f32
    %30 = vector.shape_cast %29 : vector<8x1xi1> to vector<8x1xi1>
    %31 = vector.broadcast %30 : vector<8x1xi1> to vector<8x48xi1>
    %32 = vector.broadcast %cst_11 : f32 to vector<8x48xf32>
    %33 = arith.select %31, %23, %32 : vector<8x48xi1>, vector<8x48xf32>
    %34 = vector.shape_cast %33 : vector<8x48xf32> to vector<1x8x48xf32>
    %cst_12 = arith.constant dense<0.000000e+00> : vector<1xf32>
    %35 = vector.multi_reduction <add>, %34, %cst_12 [1, 2] : vector<1x8x48xf32> to vector<1xf32>
    %36 = vector.shape_cast %35 : vector<1xf32> to vector<1x1x1xf32>
    %37 = vector.extract %36[0, 0, 0] : f32 from vector<1x1x1xf32>
    %38 = vector.broadcast %37 : f32 to vector<1x8x128xf32>
    %c0_13 = arith.constant 0 : index
    %c0_14 = arith.constant 0 : index
    %c0_15 = arith.constant 0 : index
    %39 = vector.load %arg5[%c0_13, %c0_14, %c0_15] : memref<1x8x128xf32, #tpu.memory_space<vmem>>, vector<1x8x128xf32>
    tpu.vector_store %arg5[%c0_13, %c0_14, %c0_15], %38 {strides = array<i32>} : memref<1x8x128xf32, #tpu.memory_space<vmem>>, vector<1x8x128xf32>,
    return
  }
  func.func @transform_0(%arg0: i32) -> (i32, i32) {
    %c0_i32 = arith.constant 0 : i32
    %c0_i32_0 = arith.constant 0 : i32
    return %arg0, %c0_i32 : i32, i32
  }
  func.func @transform_1(%arg0: i32) -> (i32, i32) {
    %c0_i32 = arith.constant 0 : i32
    %c0_i32_0 = arith.constant 0 : i32
    return %arg0, %c0_i32 : i32, i32
  }
  func.func @transform_2(%arg0: i32) -> (i32, i32) {
    %c0_i32 = arith.constant 0 : i32
    %c0_i32_0 = arith.constant 0 : i32
    return %arg0, %c0_i32 : i32, i32
  }
  func.func @transform_3(%arg0: i32) -> (i32, i32) {
    %c0_i32 = arith.constant 0 : i32
    %c0_i32_0 = arith.constant 0 : i32
    %c0_i32_1 = arith.constant 0 : i32
    return %c0_i32, %c0_i32_0 : i32, i32
  }
  func.func @transform_4(%arg0: i32) -> (i32, i32, i32) {
    %c0_i32 = arith.constant 0 : i32
    %c0_i32_0 = arith.constant 0 : i32
    %c0_i32_1 = arith.constant 0 : i32
    return %arg0, %c0_i32, %c0_i32_0 : i32, i32, i32
  }
}

</mosaic_0001>

<llo_original>
// kernel: tpu_custom_call.1
$region0: #{tpu_custom_call.1}
  #allocation0 [shape = 'u32[]', space=smem, size = 0x4, offset = 0x4, fixed_abs, tag = 'smem constant byte address 0x4 - core index']
  #allocation1 [shape = 'u32[144,128]{1,0:T(1,128)}', space=vmem, size = 0x12000, scoped, tag = 'internal scratch']
  %s0 = inlined_call_operand.hbm [shape: f32[2,16], index: 0, kind: input, shape index: {}]
  %s1 = inlined_call_operand.vmem [shape: f32[2,48], index: 1, kind: input, shape index: {}]
  %s2 = inlined_call_operand.vmem [shape: f32[2,16], index: 2, kind: input, shape index: {}]
  %s3 = inlined_call_operand.vmem [shape: f32[1,48], index: 3, kind: input, shape index: {}]
  %s4 = inlined_call_operand.hbm [shape: f32[1,8,128], index: 4, kind: output, shape index: {}]
  %s5 = sld [smem:[#allocation0]]
  $region30: #{tpu_custom_call.1} parent=0
    _
  %s7 = ssub.s32 1, %s5
  %s8 = scalar_select 0, %s7, %s5
  $region1: #{tpu_custom_call.1} parent=0
    #allocation2 [shape = 'u8[4096]{0}', space=vmem, size = 0x1000, scoped, tag = 'input window, operand 0, single buffered']
    #allocation3 [shape = 's32[1]{0}', space=sflag, size = 0x4, scoped, tag = 'scoped memory for tpu_custom_call.1']
    #allocation4 [shape = 's32[1]{0}', space=sflag, size = 0x4, scoped, tag = 'scoped memory for tpu_custom_call.1']
    #allocation5 [shape = 'u8[4096]{0}', space=vmem, size = 0x1000, scoped, tag = 'output window, operand 0, single buffered']
    %9 = vsyncpa [#allocation3], 0
    %10 = vsyncpa [#allocation4], 0
    // Predicated region
    $region2: #{tpu_custom_call.1} parent=1 // pred_check
      _
    $region3: #{tpu_custom_call.1} parent=1 // pred_check_branch
      %12 = sbr.rel (0) target = $region5
    $region4: #{tpu_custom_call.1} parent=1 // pred_region
      %s14 = ssub.s32 128, 32
      %15 = vsyncadd [#allocation3], %s14
      %s16 = sshll.u32 [#allocation2], 4
      %s17 = int_to_ptr.vmem [resolvable:$true] %s16
      %22 = dma.hbm_to_vmem [thread:$0]  %s0, 32, %s17, [#allocation3], 32, 32, 2
    $region5: #{tpu_custom_call.1} parent=1 // pred_fallthru
      _
    // Predicated region
    $region6: #{tpu_custom_call.1} parent=1 // pred_check
      _
    $region7: #{tpu_custom_call.1} parent=1 // pred_check_branch
      %24 = sbr.rel (0) target = $region9
    $region8: #{tpu_custom_call.1} parent=1 // pred_region
      _
    $region9: #{tpu_custom_call.1} parent=1 // pred_fallthru
      _
    // Predicated region
    $region10: #{tpu_custom_call.1} parent=1 // pred_check
      _
    $region11: #{tpu_custom_call.1} parent=1 // pred_check_branch
      %26 = sbr.rel (0) target = $region13
    $region12: #{tpu_custom_call.1} parent=1 // pred_region
      _
    $region13: #{tpu_custom_call.1} parent=1 // pred_fallthru
      _
    // Predicated region
    $region14: #{tpu_custom_call.1} parent=1 // pred_check
      _
    $region15: #{tpu_custom_call.1} parent=1 // pred_check_branch
      %28 = sbr.rel (0) target = $region17
    $region16: #{tpu_custom_call.1} parent=1 // pred_region
      _
    $region17: #{tpu_custom_call.1} parent=1 // pred_fallthru
      _
    // Predicated region
    $region18: #{tpu_custom_call.1} parent=1 // pred_check
      _
    $region19: #{tpu_custom_call.1} parent=1 // pred_check_branch
      %30 = sbr.rel (0) target = $region21
    $region20: #{tpu_custom_call.1} parent=1 // pred_region
      %31 = dma.done [#allocation3], 128
    $region21: #{tpu_custom_call.1} parent=1 // pred_fallthru
      _
    %v32 = vld [vmem:[#allocation2] sm:$0xff]
    %v33 = vld [vmem:[%s2] sm:$0xff]
    %v34 = vld [vmem:[%s1] sm:$0xff]
    %v35 = vld [vmem:[%s3] sm:$0x1]
    %37 = vrot.lane.b32.xlu0 %v32, 16
    %v38 = vpop.permute.xlu0 %37
    %40 = vrot.lane.b32.xlu0 %v32, 32
    %v41 = vpop.permute.xlu0 %40
    %vm43 = vcmask 130048
    %v44 = vsel %vm43, %v32, %v38
    %vm45 = vcmask 261120
    %v46 = vsel %vm45, %v44, %v41
    %48 = vrot.lane.b32.xlu0 %v33, 16
    %v49 = vpop.permute.xlu0 %48
    %51 = vrot.lane.b32.xlu0 %v33, 32
    %v52 = vpop.permute.xlu0 %51
    %v54 = vsel %vm43, %v33, %v49
    %v55 = vsel %vm45, %v54, %v52
    %v56 = vsub.f32 %v46, %v34
    %v57 = vand.u32 2147483647, %v56
    %vm58 = vcmp.lt.f32.partialorder %v57, 0.001
    %v59 = vmul.f32 %v56, %v56
    %v60 = vmul.f32 %v59, 500.0
    %v61 = vsub.f32 %v57, 0.0005
    %v62 = vsel %vm58, %v60, %v61
    %v63 = vmul.f32 %v55, %v62
    %v65 = vlaneseq
    %v66 = vshrl.u32 %v65, 7
    %v67 = vsub.s32 0, %v66
    %v68 = vrot.slane %v35, %v67
    %v70 = vmul.f32 %v68, %v63
    %v71 = vsub.f32 0.0, %v63
    %v72 = vmax.f32 %v71, 0.0
    %v73 = vadd.f32 %v70, %v72
    %s74 = smul.u32 0, 8
    %v75 = vlaneseq
    %v76 = vshrl.u32 %v75, 7
    %v77 = vstv %s74
    %v78 = vadd.s32 %v77, %v76
    %vm79 = vcmp.lt.s32.totalorder %v78, 2
    %v80 = vsel %vm79, 1, 0
    %vm81 = vcmp.eq.s32.totalorder %v80, 1
    %v82 = vsel %vm81, %v73, 0.0
    %vm83 = vcmask 392192
    %v84 = vsel %vm83, %v82, 0.0
    %85 = vadd.xlane.f32.xlu0 %v84
    %v86 = vpop.xlane.xlu0 %85
    %v87 = vrot.slane %v86, 4
    %v88 = vadd.f32 %v86, %v87
    %v89 = vrot.slane %v88, 2
    %v90 = vadd.f32 %v88, %v89
    %v91 = vrot.slane %v90, 1
    %v92 = vadd.f32 %v90, %v91
    %s93 = vtos %v92
    %v94 = vstv %s93
    %95 = vst [vmem:[#allocation5] sm:$0xff] %v94
    // Predicated region
    $region22: #{tpu_custom_call.1} parent=1 // pred_check
      _
    $region23: #{tpu_custom_call.1} parent=1 // pred_check_branch
      %97 = sbr.rel (0) target = $region25
    $region24: #{tpu_custom_call.1} parent=1 // pred_region
      %s99 = ssub.s32 128, 128
      %100 = vsyncadd [#allocation4], %s99
      %s102 = sshll.u32 [#allocation5], 4
      %s103 = int_to_ptr.vmem [resolvable:$true] %s102
      %105 = dma.vmem_to_hbm [thread:$0]  %s103, 128, %s4, [#allocation4]
    $region25: #{tpu_custom_call.1} parent=1 // pred_fallthru
      _
    // Predicated region
    $region26: #{tpu_custom_call.1} parent=1 // pred_check
      _
    $region27: #{tpu_custom_call.1} parent=1 // pred_check_branch
      %107 = sbr.rel (0) target = $region29
    $region28: #{tpu_custom_call.1} parent=1 // pred_region
      %108 = dma.done [#allocation4], 128
    $region29: #{tpu_custom_call.1} parent=1 // pred_fallthru
      _
    %109 = vsyncpa [#allocation3], 1
    %110 = vsyncpa [#allocation4], 1

</llo_original>
